<compile_context>
chip_gen: v5e
topology: v5e:2x2
jax: 0.10.0
libtpu: 0.0.40
codegen_flags: <defaults>
</compile_context>

<pallas_src>
import math

import jax
import jax.numpy as jnp
from jax import lax
from jax.experimental import pallas as pl
from jax.experimental.pallas import tpu as pltpu


FEAT_DIM = 512          # CLIP image-feature dim
HIDDEN_SIZE = 1024      # projector output / classifier input
NUM_LABELS = 2

_SUBLANES = 8
_LANES = 128
_MIN_MEGACORE_ROWS = 256   # split single-tile batches >= 2*this into 2 steps


def _round_up(x, m):
    return ((x + m - 1) // m) * m


# -----------------------------------------------------------------------------
# Kernel
# -----------------------------------------------------------------------------
def _head_kernel(f_ref, w_ref, b_ref, o_ref):
    """Fused: L2-normalize -> (projector@classifier) Linear, scale post-matmul."""
    f16 = f_ref[...]                                  # (TB, 512) bf16
    f32 = f16.astype(jnp.float32)

    # F.normalize(dim=-1): x / max(||x||_2, eps), eps = 1e-12.
    # 1/max(sqrt(s), eps) == rsqrt(max(s, eps^2))  (sqrt is monotone).
    sumsq = jnp.sum(f32 * f32, axis=-1, keepdims=True)          # (TB, 1) f32
    inv = lax.rsqrt(jnp.maximum(sumsq, 1e-24))                  # f32 scale

    # bf16 MXU matmul with f32 accumulation; apply the f32 scale to the output
    # (exact for a linear map, and only (TB, n_pad) elements to multiply).
    acc = jnp.dot(f16, w_ref[...], preferred_element_type=jnp.float32)
    o_ref[...] = (acc * inv + b_ref[...]).astype(o_ref.dtype)


# -----------------------------------------------------------------------------
# One-time parameter preparation (head weights are static between calls)
# -----------------------------------------------------------------------------
def prepare_clip_head_params(w_proj, b_proj, w_cls, b_cls):
    """Fuse projector + classifier and pad to a lane-aligned bf16/f32 slab.

    Call once; reuse the returned (w_p, b_p, num_labels) on every forward call.
    """
    feat_dim = w_proj.shape[0]
    num_labels = w_cls.shape[1]

    w_fused = jnp.dot(w_proj.astype(jnp.float32), w_cls.astype(jnp.float32),
                      preferred_element_type=jnp.float32)       # (512, num_labels)
    b_fused = (jnp.dot(b_proj.astype(jnp.float32), w_cls.astype(jnp.float32),
                       preferred_element_type=jnp.float32)
               + b_cls.astype(jnp.float32))                     # (num_labels,)

    n_pad = _round_up(max(num_labels, _LANES), _LANES)
    w_p = (jnp.zeros((feat_dim, n_pad), jnp.bfloat16)
           .at[:, :num_labels].set(w_fused.astype(jnp.bfloat16)))
    b_p = (jnp.zeros((1, n_pad), jnp.float32)
           .at[:, :num_labels].set(b_fused))
    return w_p, b_p, num_labels


# -----------------------------------------------------------------------------
# Batch-tile selection
# -----------------------------------------------------------------------------
def _select_batch_tiling(batch, block_b):
    """Pick (tile_rows, padded_batch).

    Guarantees: tile is a multiple of 8 and <= ~block_b; padded batch exceeds
    round_up(batch, 8) by at most (steps-1)*8 rows; large single-tile batches
    are split into >= 2 grid steps (v7x megacore)."""
    b8 = _round_up(max(batch, 1), _SUBLANES)
    tb_cap = max(_SUBLANES, _round_up(min(block_b, b8), _SUBLANES))
    n_steps = pl.cdiv(b8, tb_cap)
    if n_steps == 1 and b8 >= 2 * _MIN_MEGACORE_ROWS:
        n_steps = 2
    tb = _round_up(pl.cdiv(b8, n_steps), _SUBLANES)
    return tb, n_steps * tb


# -----------------------------------------------------------------------------
# Per-call head wrapper
# -----------------------------------------------------------------------------
def clip_linear_classifier_head(features, w_p, b_p, num_labels, *,
                                block_b=2048, out_dtype=jnp.float32):
    """features: (B, 512).  w_p/b_p from prepare_clip_head_params.
    Returns logits (B, num_labels) in `out_dtype`."""
    B, D = features.shape
    n_pad = w_p.shape[1]
    tb, b_pad = _select_batch_tiling(B, block_b)

    # bf16 cast halves the kernel's feature DMA. Under jit the cast fuses into
    # the feature producer (encoder epilogue); the few pad rows piggyback on
    # the same materialization pass (no separate full-array re-pad copy).
    feats = features.astype(jnp.bfloat16)
    if b_pad != B:
        feats = jnp.zeros((b_pad, D), jnp.bfloat16).at[:B, :].set(feats)

    grid = (b_pad // tb,)
    out = pl.pallas_call(
        _head_kernel,
        out_shape=jax.ShapeDtypeStruct((b_pad, n_pad), out_dtype),
        grid=grid,
        in_specs=[
            pl.BlockSpec((tb, D), lambda i: (i, 0)),      # feature tile, streamed
            pl.BlockSpec((D, n_pad), lambda i: (0, 0)),   # fused weight, resident
            pl.BlockSpec((1, n_pad), lambda i: (0, 0)),   # fused bias, resident
        ],
        out_specs=pl.BlockSpec((tb, n_pad), lambda i: (i, 0)),
        compiler_params=pltpu.CompilerParams(
            dimension_semantics=("parallel",),            # megacore over batch
            vmem_limit_bytes=32 * 1024 * 1024,            # safe on v5e/v6e/v7x
        ),
    )(feats, w_p, b_p)

    return out[:B, :num_labels]


# -----------------------------------------------------------------------------
# Deterministic stand-ins / reference
# -----------------------------------------------------------------------------
def _linear_init(key, fan_in, fan_out):
    """Deterministic PyTorch nn.Linear default init: U(-1/sqrt(in), 1/sqrt(in))."""
    kw, kb = jax.random.split(key)
    bound = 1.0 / math.sqrt(fan_in)
    w = jax.random.uniform(kw, (fan_in, fan_out), jnp.float32, -bound, bound)
    b = jax.random.uniform(kb, (fan_out,), jnp.float32, -bound, bound)
    return w, b


def encode_image_standin(x, w_enc):
    """Deterministic stand-in for the frozen CLIP image encoder (plain JAX glue).
    x: (B, C, H, W) NCHW  ->  (B, 512) features."""
    B = x.shape[0]
    flat = x.reshape(B, -1).astype(jnp.float32)
    return flat @ w_enc


def _reference_head(features, w_proj, b_proj, w_cls, b_cls):
    """Pure-JAX f32 reference with the original (un-fused) two-Linear structure."""
    norm = jnp.sqrt(jnp.sum(features * features, axis=-1, keepdims=True))
    f = features / jnp.maximum(norm, 1e-12)
    return (f @ w_proj + b_proj) @ w_cls + b_cls


# -----------------------------------------------------------------------------
# Demo / correctness checks
# -----------------------------------------------------------------------------
if __name__ == "__main__":
    key = jax.random.PRNGKey(0)
    k_x, k_enc, k_proj, k_cls = jax.random.split(key, 4)

    # Small synthetic image batch, NCHW (PyTorch convention).
    B, C, H, W = 2, 3, 16, 16
    x = jax.random.normal(k_x, (B, C, H, W), jnp.float32)

    # Frozen-encoder stand-in weights (deterministic).
    w_enc = jax.random.normal(k_enc, (C * H * W, FEAT_DIM), jnp.float32) * 0.02

    # Trainable head parameters (deterministic PyTorch-style init).
    w_proj, b_proj = _linear_init(k_proj, FEAT_DIM, HIDDEN_SIZE)
    w_cls, b_cls = _linear_init(k_cls, HIDDEN_SIZE, NUM_LABELS)

    # Weight fusion + lane padding hoisted out of the per-call path (done once).
    w_p, b_p, num_labels = prepare_clip_head_params(w_proj, b_proj, w_cls, b_cls)

    # --- main demo: tiny batch (grid=(1,), sublane padding) ---
    features = encode_image_standin(x, w_enc)                   # (B, 512)
    logits = clip_linear_classifier_head(features, w_p, b_p, num_labels)
    logits = jax.block_until_ready(logits)
    ref = _reference_head(features, w_proj, b_proj, w_cls, b_cls)
    assert logits.shape == (B, NUM_LABELS)
    assert jnp.allclose(logits, ref, atol=5e-3, rtol=1e-2), (
        float(jnp.max(jnp.abs(logits - ref))))

    # --- multi-step grid with a batch remainder (B=20, tb=8 -> grid=(3,)) ---
    feats2 = jax.random.normal(jax.random.PRNGKey(1), (20, FEAT_DIM), jnp.float32)
    logits2 = clip_linear_classifier_head(feats2, w_p, b_p, num_labels, block_b=8)
    logits2 = jax.block_until_ready(logits2)
    ref2 = _reference_head(feats2, w_proj, b_proj, w_cls, b_cls)
    assert logits2.shape == (20, NUM_LABELS)
    assert jnp.allclose(logits2, ref2, atol=5e-3, rtol=1e-2), (
        float(jnp.max(jnp.abs(logits2 - ref2))))

    # --- larger batch: exercises the >=2-step megacore split (B=520 -> grid=(2,)) ---
    feats3 = jax.random.normal(jax.random.PRNGKey(2), (520, FEAT_DIM), jnp.float32)
    logits3 = clip_linear_classifier_head(feats3, w_p, b_p, num_labels)
    logits3 = jax.block_until_ready(logits3)
    ref3 = _reference_head(feats3, w_proj, b_proj, w_cls, b_cls)
    assert logits3.shape == (520, NUM_LABELS)
    assert jnp.allclose(logits3, ref3, atol=5e-3, rtol=1e-2), (
        float(jnp.max(jnp.abs(logits3 - ref3))))

    print("KERNEL_OK")
</pallas_src>

<mosaic_0001>
module attributes {stable_mosaic.version = 11 : i64} {
  func.func @_head_kernel(%arg0: i32, %arg1: memref<8x512xbf16, #tpu.memory_space<vmem>>, %arg2: memref<512x128xbf16, #tpu.memory_space<vmem>>, %arg3: memref<1x128xf32, #tpu.memory_space<vmem>>, %arg4: memref<8x128xf32, #tpu.memory_space<vmem>>) attributes {dimension_semantics = [#tpu.dimension_semantics<parallel>], iteration_bounds = array<i64: 1>, scalar_prefetch = 0 : i64, scratch_operands = 0 : i64, tpu.core_type = #tpu.core_type<tc>, window_params = [{transform_indices = @transform_0, window_bounds = array<i64: 8, 512>}, {pipeline_mode = #tpu.pipeline_mode<synchronous>, transform_indices = @transform_1, window_bounds = array<i64: 512, 128>}, {pipeline_mode = #tpu.pipeline_mode<synchronous>, transform_indices = @transform_2, window_bounds = array<i64: 1, 128>}, {transform_indices = @transform_3, window_bounds = array<i64: 8, 128>}]} {
    %c0 = arith.constant 0 : index
    %c0_0 = arith.constant 0 : index
    %0 = vector.load %arg1[%c0, %c0_0] : memref<8x512xbf16, #tpu.memory_space<vmem>>, vector<8x512xbf16>
    %1 = arith.extf %0 : vector<8x512xbf16> to vector<8x512xf32>
    %2 = arith.mulf %1, %1 : vector<8x512xf32>
    %cst = arith.constant dense<0.000000e+00> : vector<8xf32>
    %3 = vector.multi_reduction <add>, %2, %cst [1] : vector<8x512xf32> to vector<8xf32>
    %4 = vector.shape_cast %3 : vector<8xf32> to vector<8x1xf32>
    %cst_1 = arith.constant 1.000000e-24 : f32
    %5 = vector.broadcast %cst_1 : f32 to vector<8x1xf32>
    %6 = arith.maximumf %4, %5 : vector<8x1xf32>
    %7 = math.rsqrt %6 : vector<8x1xf32>
    %c0_2 = arith.constant 0 : index
    %c0_3 = arith.constant 0 : index
    %8 = vector.load %arg2[%c0_2, %c0_3] : memref<512x128xbf16, #tpu.memory_space<vmem>>, vector<512x128xbf16>
    %cst_4 = arith.constant dense<0.000000e+00> : vector<8x128xf32>
    %9 = tpu.matmul %0, %8, %cst_4 {dimension_numbers = #tpu.dot_dimension_numbers<[1], [0], [0], [1], [0, 0, 1, 1], [], []>} : vector<8x512xbf16>, vector<512x128xbf16>, vector<8x128xf32> -> vector<8x128xf32>
    %10 = vector.broadcast %7 : vector<8x1xf32> to vector<8x128xf32>
    %11 = arith.mulf %9, %10 : vector<8x128xf32>
    %c0_5 = arith.constant 0 : index
    %c0_6 = arith.constant 0 : index
    %12 = vector.load %arg3[%c0_5, %c0_6] : memref<1x128xf32, #tpu.memory_space<vmem>>, vector<1x128xf32>
    %13 = vector.broadcast %12 : vector<1x128xf32> to vector<8x128xf32>
    %14 = arith.addf %11, %13 : vector<8x128xf32>
    %c0_7 = arith.constant 0 : index
    %c0_8 = arith.constant 0 : index
    %15 = vector.load %arg4[%c0_7, %c0_8] : memref<8x128xf32, #tpu.memory_space<vmem>>, vector<8x128xf32>
    tpu.vector_store %arg4[%c0_7, %c0_8], %14 {strides = array<i32>} : memref<8x128xf32, #tpu.memory_space<vmem>>, vector<8x128xf32>,
    return
  }
  func.func @transform_0(%arg0: i32) -> (i32, i32) {
    %c0_i32 = arith.constant 0 : i32
    %c0_i32_0 = arith.constant 0 : i32
    return %arg0, %c0_i32 : i32, i32
  }
  func.func @transform_1(%arg0: i32) -> (i32, i32) {
    %c0_i32 = arith.constant 0 : i32
    %c0_i32_0 = arith.constant 0 : i32
    %c0_i32_1 = arith.constant 0 : i32
    return %c0_i32, %c0_i32_0 : i32, i32
  }
  func.func @transform_2(%arg0: i32) -> (i32, i32) {
    %c0_i32 = arith.constant 0 : i32
    %c0_i32_0 = arith.constant 0 : i32
    %c0_i32_1 = arith.constant 0 : i32
    return %c0_i32, %c0_i32_0 : i32, i32
  }
  func.func @transform_3(%arg0: i32) -> (i32, i32) {
    %c0_i32 = arith.constant 0 : i32
    %c0_i32_0 = arith.constant 0 : i32
    return %arg0, %c0_i32 : i32, i32
  }
}

</mosaic_0001>

<llo_original>
// kernel: tpu_custom_call.1
$region0: #{tpu_custom_call.1}
  #allocation0 [shape = 'u32[]', space=smem, size = 0x4, offset = 0x4, fixed_abs, tag = 'smem constant byte address 0x4 - core index']
  #allocation1 [shape = 'u32[72,128]{1,0:T(1,128)}', space=vmem, size = 0x9000, scoped, tag = 'internal scratch']
  %s0 = inlined_call_operand.hbm [shape: bf16[8,512], index: 0, kind: input, shape index: {}]
  %s1 = inlined_call_operand.hbm [shape: bf16[512,128], index: 1, kind: input, shape index: {}]
  %s2 = inlined_call_operand.vmem [shape: f32[1,128], index: 2, kind: input, shape index: {}]
  %s3 = inlined_call_operand.hbm [shape: f32[8,128], index: 3, kind: output, shape index: {}]
  %s4 = sld [smem:[#allocation0]]
  $region30: #{tpu_custom_call.1} parent=0
    _
  %s6 = ssub.s32 1, %s4
  %s7 = scalar_select 0, %s6, %s4
  $region1: #{tpu_custom_call.1} parent=0
    #allocation2 [shape = 'u8[8192]{0}', space=vmem, size = 0x2000, scoped, tag = 'input window, operand 0, single buffered']
    #allocation3 [shape = 's32[1]{0}', space=sflag, size = 0x4, scoped, tag = 'scoped memory for tpu_custom_call.1']
    #allocation4 [shape = 's32[1]{0}', space=sflag, size = 0x4, scoped, tag = 'scoped memory for tpu_custom_call.1']
    #allocation5 [shape = 'u8[131072]{0}', space=vmem, size = 0x20000, scoped, tag = 'input window, operand 1, single buffered']
    #allocation6 [shape = 's32[1]{0}', space=sflag, size = 0x4, scoped, tag = 'scoped memory for tpu_custom_call.1']
    #allocation7 [shape = 'u8[4096]{0}', space=vmem, size = 0x1000, scoped, tag = 'output window, operand 0, single buffered']
    %8 = vsyncpa [#allocation3], 0
    %9 = vsyncpa [#allocation6], 0
    %10 = vsyncpa [#allocation4], 0
    // Predicated region
    $region2: #{tpu_custom_call.1} parent=1 // pred_check
      _
    $region3: #{tpu_custom_call.1} parent=1 // pred_check_branch
      %12 = sbr.rel (0) target = $region5
    $region4: #{tpu_custom_call.1} parent=1 // pred_region
      %14 = vsyncadd [#allocation3], 0
      %s16 = sshll.u32 %s0, 4
      %s17 = int_to_ptr.hbm [resolvable:$true] %s16
      %s18 = sshll.u32 [#allocation2], 4
      %s19 = int_to_ptr.vmem [resolvable:$true] %s18
      %21 = dma.hbm_to_vmem [thread:$0]  %s17, 256, %s19, [#allocation3]
    $region5: #{tpu_custom_call.1} parent=1 // pred_fallthru
      _
    // Predicated region
    $region6: #{tpu_custom_call.1} parent=1 // pred_check
      _
    $region7: #{tpu_custom_call.1} parent=1 // pred_check_branch
      %23 = sbr.rel (0) target = $region9
    $region8: #{tpu_custom_call.1} parent=1 // pred_region
      %25 = vsyncadd [#allocation6], 0
      %s26 = sshll.u32 %s1, 4
      %s27 = int_to_ptr.hbm [resolvable:$true] %s26
      %s28 = sshll.u32 [#allocation5], 4
      %s29 = int_to_ptr.vmem [resolvable:$true] %s28
      %34 = dma.hbm_to_vmem [thread:$0]  %s27, 4096, %s29, [#allocation6], 64, 64, 4
    $region9: #{tpu_custom_call.1} parent=1 // pred_fallthru
      _
    // Predicated region
    $region10: #{tpu_custom_call.1} parent=1 // pred_check
      _
    $region11: #{tpu_custom_call.1} parent=1 // pred_check_branch
      %36 = sbr.rel (0) target = $region13
    $region12: #{tpu_custom_call.1} parent=1 // pred_region
      _
    $region13: #{tpu_custom_call.1} parent=1 // pred_fallthru
      _
    // Predicated region
    $region14: #{tpu_custom_call.1} parent=1 // pred_check
      _
    $region15: #{tpu_custom_call.1} parent=1 // pred_check_branch
      %38 = sbr.rel (0) target = $region17
    $region16: #{tpu_custom_call.1} parent=1 // pred_region
      %40 = dma.done [#allocation3], 256
    $region17: #{tpu_custom_call.1} parent=1 // pred_fallthru
      _
    // Predicated region
    $region18: #{tpu_custom_call.1} parent=1 // pred_check
      _
    $region19: #{tpu_custom_call.1} parent=1 // pred_check_branch
      %42 = sbr.rel (0) target = $region21
    $region20: #{tpu_custom_call.1} parent=1 // pred_region
      %44 = dma.done [#allocation6], 4096
    $region21: #{tpu_custom_call.1} parent=1 // pred_fallthru
      _
    %v45 = vld [vmem:[#allocation2] sm:$0xff]
    %v46 = vld [vmem:[#allocation2 + $0x8] sm:$0xff]
    %v47 = vunpack.c.l.bf16 %v45
    %v48 = vunpack.c.h.bf16 %v45
    %v49 = vunpack.c.l.bf16 %v46
    %v50 = vunpack.c.h.bf16 %v46
    %v51 = vmul.f32 %v47, %v47
    %v52 = vmul.f32 %v48, %v48
    %v53 = vmul.f32 %v49, %v49
    %v54 = vmul.f32 %v50, %v50
    %v55 = vadd.f32 %v51, %v52
    %v56 = vadd.f32 %v55, %v53
    %v57 = vadd.f32 %v56, %v54
    %58 = vadd.xlane.f32.xlu0 %v57
    %v59 = vpop.xlane.xlu0 %58
    %v60 = vmax.f32 %v59, 1e-24
    %v61 = vrsqrt.pop %v60
    %v62 = vmul.f32 %v61, %v60
    %v63 = vmul.f32 %v62, %v61
    %v64 = vmul.f32 0.5, %v63
    %v65 = vsub.f32 1.5, %v64
    %v66 = vmul.f32 %v61, %v65
    %vm67 = vweird.f32 %v60
    %vm68 = vweird.f32 %v61
    %vm69 = vmor %vm67, %vm68
    %v70 = vsel %vm69, %v61, %v66
    %v71 = vld [vmem:[#allocation5] sm:$0xf]
    %v72 = vld [vmem:[#allocation5 + $0x4] sm:$0xf]
    %v73 = vld [vmem:[#allocation5 + $0x8] sm:$0xf]
    %v74 = vld [vmem:[#allocation5 + $0xc] sm:$0xf]
    %v75 = vld [vmem:[#allocation5 + $0x10] sm:$0xf]
    %v76 = vld [vmem:[#allocation5 + $0x14] sm:$0xf]
    %v77 = vld [vmem:[#allocation5 + $0x18] sm:$0xf]
    %v78 = vld [vmem:[#allocation5 + $0x1c] sm:$0xf]
    %v79 = vld [vmem:[#allocation5 + $0x20] sm:$0xf]
    %v80 = vld [vmem:[#allocation5 + $0x24] sm:$0xf]
    %v81 = vld [vmem:[#allocation5 + $0x28] sm:$0xf]
    %v82 = vld [vmem:[#allocation5 + $0x2c] sm:$0xf]
    %v83 = vld [vmem:[#allocation5 + $0x30] sm:$0xf]
    %v84 = vld [vmem:[#allocation5 + $0x34] sm:$0xf]
    %v85 = vld [vmem:[#allocation5 + $0x38] sm:$0xf]
    %v86 = vld [vmem:[#allocation5 + $0x3c] sm:$0xf]
    %v87 = vld [vmem:[#allocation5 + $0x40] sm:$0xf]
    %v88 = vld [vmem:[#allocation5 + $0x44] sm:$0xf]
    %v89 = vld [vmem:[#allocation5 + $0x48] sm:$0xf]
    %v90 = vld [vmem:[#allocation5 + $0x4c] sm:$0xf]
    %v91 = vld [vmem:[#allocation5 + $0x50] sm:$0xf]
    %v92 = vld [vmem:[#allocation5 + $0x54] sm:$0xf]
    %v93 = vld [vmem:[#allocation5 + $0x58] sm:$0xf]
    %v94 = vld [vmem:[#allocation5 + $0x5c] sm:$0xf]
    %v95 = vld [vmem:[#allocation5 + $0x60] sm:$0xf]
    %v96 = vld [vmem:[#allocation5 + $0x64] sm:$0xf]
    %v97 = vld [vmem:[#allocation5 + $0x68] sm:$0xf]
    %v98 = vld [vmem:[#allocation5 + $0x6c] sm:$0xf]
    %v99 = vld [vmem:[#allocation5 + $0x70] sm:$0xf]
    %v100 = vld [vmem:[#allocation5 + $0x74] sm:$0xf]
    %v101 = vld [vmem:[#allocation5 + $0x78] sm:$0xf]
    %v102 = vld [vmem:[#allocation5 + $0x7c] sm:$0xf]
    %v103 = vld [vmem:[#allocation5 + $0x80] sm:$0xf]
    %v104 = vld [vmem:[#allocation5 + $0x84] sm:$0xf]
    %v105 = vld [vmem:[#allocation5 + $0x88] sm:$0xf]
    %v106 = vld [vmem:[#allocation5 + $0x8c] sm:$0xf]
    %v107 = vld [vmem:[#allocation5 + $0x90] sm:$0xf]
    %v108 = vld [vmem:[#allocation5 + $0x94] sm:$0xf]
    %v109 = vld [vmem:[#allocation5 + $0x98] sm:$0xf]
    %v110 = vld [vmem:[#allocation5 + $0x9c] sm:$0xf]
    %v111 = vld [vmem:[#allocation5 + $0xa0] sm:$0xf]
    %v112 = vld [vmem:[#allocation5 + $0xa4] sm:$0xf]
    %v113 = vld [vmem:[#allocation5 + $0xa8] sm:$0xf]
    %v114 = vld [vmem:[#allocation5 + $0xac] sm:$0xf]
    %v115 = vld [vmem:[#allocation5 + $0xb0] sm:$0xf]
    %v116 = vld [vmem:[#allocation5 + $0xb4] sm:$0xf]
    %v117 = vld [vmem:[#allocation5 + $0xb8] sm:$0xf]
    %v118 = vld [vmem:[#allocation5 + $0xbc] sm:$0xf]
    %v119 = vld [vmem:[#allocation5 + $0xc0] sm:$0xf]
    %v120 = vld [vmem:[#allocation5 + $0xc4] sm:$0xf]
    %v121 = vld [vmem:[#allocation5 + $0xc8] sm:$0xf]
    %v122 = vld [vmem:[#allocation5 + $0xcc] sm:$0xf]
    %v123 = vld [vmem:[#allocation5 + $0xd0] sm:$0xf]
    %v124 = vld [vmem:[#allocation5 + $0xd4] sm:$0xf]
    %v125 = vld [vmem:[#allocation5 + $0xd8] sm:$0xf]
    %v126 = vld [vmem:[#allocation5 + $0xdc] sm:$0xf]
    %v127 = vld [vmem:[#allocation5 + $0xe0] sm:$0xf]
    %v128 = vld [vmem:[#allocation5 + $0xe4] sm:$0xf]
    %v129 = vld [vmem:[#allocation5 + $0xe8] sm:$0xf]
    %v130 = vld [vmem:[#allocation5 + $0xec] sm:$0xf]
    %v131 = vld [vmem:[#allocation5 + $0xf0] sm:$0xf]
    %v132 = vld [vmem:[#allocation5 + $0xf4] sm:$0xf]
    %v133 = vld [vmem:[#allocation5 + $0xf8] sm:$0xf]
    %v134 = vld [vmem:[#allocation5 + $0xfc] sm:$0xf]
    %v137 = vunpack.c.l.b16 %v45
    %v138 = vunpack.c.h.b16 %v45
    %v139 = vunpack.c.l.b16 %v46
    %v140 = vunpack.c.h.b16 %v46
    %v141 = vpack.c.b16 %v137, %v137
    %v142 = vpack.c.b16 %v138, %v138
    %v143 = vpack.c.b16 %v139, %v139
    %v144 = vpack.c.b16 %v140, %v140
    %v213 = vunpack.c.l.b16 %v71
    %v214 = vunpack.c.l.b16 %v72
    %v215 = vunpack.c.l.b16 %v73
    %v216 = vunpack.c.l.b16 %v74
    %v217 = vunpack.c.l.b16 %v75
    %v218 = vunpack.c.l.b16 %v76
    %v219 = vunpack.c.l.b16 %v77
    %v220 = vunpack.c.l.b16 %v78
    %v221 = vunpack.c.l.b16 %v79
    %v222 = vunpack.c.l.b16 %v80
    %v223 = vunpack.c.l.b16 %v81
    %v224 = vunpack.c.l.b16 %v82
    %v225 = vunpack.c.l.b16 %v83
    %v226 = vunpack.c.l.b16 %v84
    %v227 = vunpack.c.l.b16 %v85
    %v228 = vunpack.c.l.b16 %v86
    %v229 = vunpack.c.l.b16 %v87
    %v230 = vunpack.c.l.b16 %v88
    %v231 = vunpack.c.l.b16 %v89
    %v232 = vunpack.c.l.b16 %v90
    %v233 = vunpack.c.l.b16 %v91
    %v234 = vunpack.c.l.b16 %v92
    %v235 = vunpack.c.l.b16 %v93
    %v236 = vunpack.c.l.b16 %v94
    %v237 = vunpack.c.l.b16 %v95
    %v238 = vunpack.c.l.b16 %v96
    %v239 = vunpack.c.l.b16 %v97
    %v240 = vunpack.c.l.b16 %v98
    %v241 = vunpack.c.l.b16 %v99
    %v242 = vunpack.c.l.b16 %v100
    %v243 = vunpack.c.l.b16 %v101
    %v244 = vunpack.c.l.b16 %v102
    %v245 = vunpack.c.l.b16 %v103
    %v246 = vunpack.c.l.b16 %v104
    %v247 = vunpack.c.l.b16 %v105
    %v248 = vunpack.c.l.b16 %v106
    %v249 = vunpack.c.l.b16 %v107
    %v250 = vunpack.c.l.b16 %v108
    %v251 = vunpack.c.l.b16 %v109
    %v252 = vunpack.c.l.b16 %v110
    %v253 = vunpack.c.l.b16 %v111
    %v254 = vunpack.c.l.b16 %v112
    %v255 = vunpack.c.l.b16 %v113
    %v256 = vunpack.c.l.b16 %v114
    %v257 = vunpack.c.l.b16 %v115
    %v258 = vunpack.c.l.b16 %v116
    %v259 = vunpack.c.l.b16 %v117
    %v260 = vunpack.c.l.b16 %v118
    %v261 = vunpack.c.l.b16 %v119
    %v262 = vunpack.c.l.b16 %v120
    %v263 = vunpack.c.l.b16 %v121
    %v264 = vunpack.c.l.b16 %v122
    %v265 = vunpack.c.l.b16 %v123
    %v266 = vunpack.c.l.b16 %v124
    %v267 = vunpack.c.l.b16 %v125
    %v268 = vunpack.c.l.b16 %v126
    %v269 = vunpack.c.l.b16 %v127
    %v270 = vunpack.c.l.b16 %v128
    %v271 = vunpack.c.l.b16 %v129
    %v272 = vunpack.c.l.b16 %v130
    %v273 = vunpack.c.l.b16 %v131
    %v274 = vunpack.c.l.b16 %v132
    %v275 = vunpack.c.l.b16 %v133
    %v276 = vunpack.c.l.b16 %v134
    %v277 = vpack.c.b16 %v214, %v213
    %v278 = vpack.c.b16 %v216, %v215
    %v279 = vpack.c.b16 %v218, %v217
    %v280 = vpack.c.b16 %v220, %v219
    %v281 = vpack.c.b16 %v222, %v221
    %v282 = vpack.c.b16 %v224, %v223
    %v283 = vpack.c.b16 %v226, %v225
    %v284 = vpack.c.b16 %v228, %v227
    %v285 = vpack.c.b16 %v230, %v229
    %v286 = vpack.c.b16 %v232, %v231
    %v287 = vpack.c.b16 %v234, %v233
    %v288 = vpack.c.b16 %v236, %v235
    %v289 = vpack.c.b16 %v238, %v237
    %v290 = vpack.c.b16 %v240, %v239
    %v291 = vpack.c.b16 %v242, %v241
    %v292 = vpack.c.b16 %v244, %v243
    %v293 = vpack.c.b16 %v246, %v245
    %v294 = vpack.c.b16 %v248, %v247
    %v295 = vpack.c.b16 %v250, %v249
    %v296 = vpack.c.b16 %v252, %v251
    %v297 = vpack.c.b16 %v254, %v253
    %v298 = vpack.c.b16 %v256, %v255
    %v299 = vpack.c.b16 %v258, %v257
    %v300 = vpack.c.b16 %v260, %v259
    %v301 = vpack.c.b16 %v262, %v261
    %v302 = vpack.c.b16 %v264, %v263
    %v303 = vpack.c.b16 %v266, %v265
    %v304 = vpack.c.b16 %v268, %v267
    %v305 = vpack.c.b16 %v270, %v269
    %v306 = vpack.c.b16 %v272, %v271
    %v307 = vpack.c.b16 %v274, %v273
    %v308 = vpack.c.b16 %v276, %v275
    %341 = vmatpush.bf16.msra.mxu0 %v284
    %342 = vmatpush.bf16.msra.mxu0 %v283
    %343 = vmatpush.bf16.msra.mxu0 %v282
    %344 = vmatpush.bf16.msra.mxu0 %v281
    %345 = vmatpush.bf16.msra.mxu0 %v280
    %346 = vmatpush.bf16.msra.mxu0 %v279
    %347 = vmatpush.bf16.msra.mxu0 %v278
    %348 = vmatpush.bf16.msra.mxu0 %v277
    %349 = vmatmul.bf16.gmra.mxu0 %v141
    %v350 = vpop.f32.mrf.mxu0
    %v351 = vadd.f32 0.0, %v350
    %v352 = vpop.f32.mrf.mxu0
    %353 = vdwg.mxu0
    %354 = vmatpush.bf16.msra.mxu0 %v292
    %355 = vmatpush.bf16.msra.mxu0 %v291
    %356 = vmatpush.bf16.msra.mxu0 %v290
    %357 = vmatpush.bf16.msra.mxu0 %v289
    %358 = vmatpush.bf16.msra.mxu0 %v288
    %359 = vmatpush.bf16.msra.mxu0 %v287
    %360 = vmatpush.bf16.msra.mxu0 %v286
    %361 = vmatpush.bf16.msra.mxu0 %v285
    %362 = vmatmul.bf16.gmra.mxu0 %v142
    %v363 = vpop.f32.mrf.mxu0
    %v364 = vadd.f32 %v351, %v363
    %v365 = vpop.f32.mrf.mxu0
    %366 = vdwg.mxu0
    %367 = vmatpush.bf16.msra.mxu0 %v300
    %368 = vmatpush.bf16.msra.mxu0 %v299
    %369 = vmatpush.bf16.msra.mxu0 %v298
    %370 = vmatpush.bf16.msra.mxu0 %v297
    %371 = vmatpush.bf16.msra.mxu0 %v296
    %372 = vmatpush.bf16.msra.mxu0 %v295
    %373 = vmatpush.bf16.msra.mxu0 %v294
    %374 = vmatpush.bf16.msra.mxu0 %v293
    %375 = vmatmul.bf16.gmra.mxu0 %v143
    %v376 = vpop.f32.mrf.mxu0
    %v377 = vadd.f32 %v364, %v376
    %v378 = vpop.f32.mrf.mxu0
    %379 = vdwg.mxu0
    %380 = vmatpush.bf16.msra.mxu0 %v308
    %381 = vmatpush.bf16.msra.mxu0 %v307
    %382 = vmatpush.bf16.msra.mxu0 %v306
    %383 = vmatpush.bf16.msra.mxu0 %v305
    %384 = vmatpush.bf16.msra.mxu0 %v304
    %385 = vmatpush.bf16.msra.mxu0 %v303
    %386 = vmatpush.bf16.msra.mxu0 %v302
    %387 = vmatpush.bf16.msra.mxu0 %v301
    %388 = vmatmul.bf16.gmra.mxu0 %v144
    %v389 = vpop.f32.mrf.mxu0
    %v390 = vadd.f32 %v377, %v389
    %v391 = vpop.f32.mrf.mxu0
    %392 = vdwg.mxu0
    %v393 = vmul.f32 %v390, %v70
    %v394 = vld [vmem:[%s2] sm:$0x1]
    %v396 = vperm.slane %v394, 0
    %v398 = vadd.f32 %v393, %v396
    %399 = vst [vmem:[#allocation7] sm:$0xff] %v398
    // Predicated region
    $region22: #{tpu_custom_call.1} parent=1 // pred_check
      _
    $region23: #{tpu_custom_call.1} parent=1 // pred_check_branch
      %401 = sbr.rel (0) target = $region25
    $region24: #{tpu_custom_call.1} parent=1 // pred_region
      %403 = vsyncadd [#allocation4], 0
      %s405 = sshll.u32 [#allocation7], 4
      %s406 = int_to_ptr.vmem [resolvable:$true] %s405
      %s407 = sshll.u32 %s3, 4
      %s408 = int_to_ptr.hbm [resolvable:$true] %s407
      %410 = dma.vmem_to_hbm [thread:$0]  %s406, 128, %s408, [#allocation4]
    $region25: #{tpu_custom_call.1} parent=1 // pred_fallthru
      _
    // Predicated region
    $region26: #{tpu_custom_call.1} parent=1 // pred_check
      _
    $region27: #{tpu_custom_call.1} parent=1 // pred_check_branch
      %412 = sbr.rel (0) target = $region29
    $region28: #{tpu_custom_call.1} parent=1 // pred_region
      %414 = dma.done [#allocation4], 128
    $region29: #{tpu_custom_call.1} parent=1 // pred_fallthru
      _
    %415 = vsyncpa [#allocation3], 1
    %416 = vsyncpa [#allocation6], 1
    %417 = vsyncpa [#allocation4], 1

</llo_original>
